<compile_context>
chip_gen: v7x
topology: tpu7x:2x2x1
jax: 0.10.0
libtpu: 0.0.40
codegen_flags: <defaults>
</compile_context>

<pallas_src>
import jax
import jax.numpy as jnp
import numpy as np
from jax.experimental import pallas as pl
from jax.experimental.pallas import tpu as pltpu


def _round_up(x, m):
    return ((x + m - 1) // m) * m


def _cdiv(a, b):
    return (a + b - 1) // b


def _texture_net_p_kernel(x_ref, w1_ref, t1_ref, w2_ref, b2_ref, o_ref):
    # layer 0: Conv2d(Cin, hidden, 1, bias=False) + folded BatchNorm2d + ReLU
    x = x_ref[...].astype(jnp.bfloat16)                       # (C, tile)
    h = jnp.dot(w1_ref[...], x, preferred_element_type=jnp.float32)
    h = jnp.maximum(h + t1_ref[...], 0.0)                     # f32 VPU math
    # layer 1: Conv2d(hidden, Cout, 1, bias=True)
    y = jnp.dot(w2_ref[...], h.astype(jnp.bfloat16),
                preferred_element_type=jnp.float32) + b2_ref[...]
    # final activation: Sigmoid (EUP exp, f32)
    o_ref[...] = jax.nn.sigmoid(y)


def texture_net_p_forward(x_nchw, params, positional_encoding=None,
                          use_cosine_positional_encoding=True, max_tile_p=8192):
    """Forward pass of TextureNetP (eval mode, default n_layers=2).

    x_nchw: (N, C, H, W) float32
    params: dict with w1 (hidden, Cin), bn_gamma / bn_beta / bn_mean / bn_var
            (hidden,), w2 (Cout, hidden), b2 (Cout,)
    """
    # ---- positional-encoding branch (cheap elementwise glue, plain JAX) ----
    # TODO(synk): the conv1 path (positional_encoding_in_channels) is not
    # implemented; only the default module configuration is supported.
    if positional_encoding is not None:
        x_pos = x_nchw * jnp.pi
        x_pos = jnp.concatenate([x_pos * i for i in positional_encoding], axis=-3)
        if use_cosine_positional_encoding:
            x_nchw = jnp.concatenate([x_nchw, jnp.sin(x_pos), jnp.cos(x_pos)], axis=-3)
        else:
            x_nchw = jnp.concatenate([x_nchw, jnp.sin(x_pos)], axis=-3)

    N, C, H, W = x_nchw.shape
    hidden = params["w1"].shape[0]
    cout = params["w2"].shape[0]
    HW = H * W

    # Free reshape: NCHW -> (N, C, HW); channels on sublanes, pixels on lanes.
    x = x_nchw.reshape(N, C, HW)

    # Lane-aligned pixel tile per image (multiple of 128, or the full HW when
    # HW < 128).  Ragged last tile is handled by Pallas masked stores.
    if HW < 128:
        tile_hw = HW
    else:
        tile_hw = min(max_tile_p, (HW // 128) * 128)
    num_hw_tiles = _cdiv(HW, tile_hw)
    if N * num_hw_tiles < 2 and tile_hw > 128:
        # v7x has 2 TensorCores: make sure the parallel grid has >= 2 steps.
        tile_hw = max(128, _round_up(_cdiv(HW, 2), 128))
        num_hw_tiles = _cdiv(HW, tile_hw)

    # Fold eval-mode BatchNorm: scale into w1, shift kept as a per-channel bias.
    # TODO(synk): training-mode BN (batch statistics over N,H,W) not implemented.
    eps = 1e-5
    scale = params["bn_gamma"] / jnp.sqrt(params["bn_var"] + eps)
    shift = params["bn_beta"] - params["bn_mean"] * scale

    w1f = (params["w1"] * scale[:, None]).astype(jnp.bfloat16)   # (hidden, Cin) MXU operand
    t1 = shift.reshape(hidden, 1).astype(jnp.float32)            # (hidden, 1)   f32 bias
    w2 = params["w2"].astype(jnp.bfloat16)                       # (Cout, hidden) MXU operand
    b2 = params["b2"].reshape(cout, 1).astype(jnp.float32)       # (Cout, 1)     f32 bias

    grid = (N, num_hw_tiles)
    out = pl.pallas_call(
        _texture_net_p_kernel,
        out_shape=jax.ShapeDtypeStruct((N, cout, HW), jnp.float32),
        grid_spec=pltpu.PrefetchScalarGridSpec(
            num_scalar_prefetch=0,
            grid=grid,
            in_specs=[
                # x tile: batch dim squeezed, pixels lane-dense.
                pl.BlockSpec((None, C, tile_hw), lambda n, i: (n, 0, i)),
                pl.BlockSpec((hidden, C), lambda n, i: (0, 0)),      # w1*bn_scale (resident)
                pl.BlockSpec((hidden, 1), lambda n, i: (0, 0)),      # bn shift
                pl.BlockSpec((cout, hidden), lambda n, i: (0, 0)),   # w2 (resident)
                pl.BlockSpec((cout, 1), lambda n, i: (0, 0)),        # conv2 bias
            ],
            out_specs=pl.BlockSpec((None, cout, tile_hw), lambda n, i: (n, 0, i)),
        ),
        compiler_params=pltpu.CompilerParams(
            dimension_semantics=("parallel", "parallel")),
    )(x, w1f, t1, w2, b2)

    # Free reshape: (N, Cout, HW) -> NCHW.
    return out.reshape(N, cout, H, W)


def _reference_forward(x_nchw, params):
    """Pure-JAX reference of the default (no positional encoding) path."""
    eps = 1e-5
    N, C, H, W = x_nchw.shape
    x = jnp.transpose(x_nchw, (0, 2, 3, 1)).reshape(-1, C)
    h = x @ params["w1"].T
    scale = params["bn_gamma"] / jnp.sqrt(params["bn_var"] + eps)
    shift = params["bn_beta"] - params["bn_mean"] * scale
    h = jnp.maximum(h * scale + shift, 0.0)
    y = h @ params["w2"].T + params["b2"]
    y = jax.nn.sigmoid(y)
    cout = params["w2"].shape[0]
    return jnp.transpose(y.reshape(N, H, W, cout), (0, 3, 1, 2))


def init_params(key, in_channels=6, hidden_size=128, out_channels=3):
    k1, k2, k3, k4, k5 = jax.random.split(key, 5)
    # deterministic synthetic init (kaiming-uniform-like bounds for 1x1 convs)
    lim1 = 1.0 / np.sqrt(in_channels)
    lim2 = 1.0 / np.sqrt(hidden_size)
    return {
        "w1": jax.random.uniform(k1, (hidden_size, in_channels), jnp.float32, -lim1, lim1),
        "bn_gamma": 1.0 + 0.1 * jax.random.normal(k2, (hidden_size,), jnp.float32),
        "bn_beta": 0.1 * jax.random.normal(k3, (hidden_size,), jnp.float32),
        "bn_mean": 0.05 * jax.random.normal(k2, (hidden_size,), jnp.float32),
        "bn_var": 1.0 + 0.1 * jax.random.uniform(k3, (hidden_size,), jnp.float32),
        "w2": jax.random.uniform(k4, (out_channels, hidden_size), jnp.float32, -lim2, lim2),
        "b2": jax.random.uniform(k5, (out_channels,), jnp.float32, -lim2, lim2),
    }


if __name__ == "__main__":
    key = jax.random.PRNGKey(0)
    kx, kx2, kp = jax.random.split(key, 3)

    params = init_params(kp, in_channels=6, hidden_size=128, out_channels=3)

    # bf16 MXU operands with f32 accumulation -> loosened tolerances.
    RTOL, ATOL = 2e-2, 2e-2

    # Case 1: small image (HW = 256 per image, grid = (2, 1)).
    N, C, H, W = 2, 6, 16, 16
    x = jax.random.normal(kx, (N, C, H, W), jnp.float32)
    out = jax.block_until_ready(texture_net_p_forward(x, params))
    ref = _reference_forward(x, params)
    assert out.shape == (N, 3, H, W), out.shape
    np.testing.assert_allclose(np.asarray(out), np.asarray(ref), rtol=RTOL, atol=ATOL)

    # Case 2: non-tile-multiple pixel count (HW = 1600 -> tile 1536, grid =
    # (2, 2), ragged last tile handled by Pallas masked stores).
    N2, H2, W2 = 2, 40, 40
    x2 = jax.random.normal(kx2, (N2, C, H2, W2), jnp.float32)
    out2 = jax.block_until_ready(texture_net_p_forward(x2, params))
    ref2 = _reference_forward(x2, params)
    assert out2.shape == (N2, 3, H2, W2), out2.shape
    np.testing.assert_allclose(np.asarray(out2), np.asarray(ref2), rtol=RTOL, atol=ATOL)

    print("KERNEL_OK")
</pallas_src>

<mosaic_0001>
module attributes {stable_mosaic.version = 11 : i64} {
  func.func @_texture_net_p_kernel(%arg0: i32, %arg1: i32, %arg2: memref<1x6x256xf32, #tpu.memory_space<vmem>>, %arg3: memref<128x6xbf16, #tpu.memory_space<vmem>>, %arg4: memref<128x1xf32, #tpu.memory_space<vmem>>, %arg5: memref<3x128xbf16, #tpu.memory_space<vmem>>, %arg6: memref<3x1xf32, #tpu.memory_space<vmem>>, %arg7: memref<1x3x256xf32, #tpu.memory_space<vmem>>) attributes {dimension_semantics = [#tpu.dimension_semantics<parallel>, #tpu.dimension_semantics<parallel>], iteration_bounds = array<i64: 2, 1>, scalar_prefetch = 0 : i64, scratch_operands = 0 : i64, tpu.core_type = #tpu.core_type<tc>, window_params = [{transform_indices = @transform_0, window_bounds = array<i64: 1, 6, 256>}, {pipeline_mode = #tpu.pipeline_mode<synchronous>, transform_indices = @transform_1, window_bounds = array<i64: 128, 6>}, {pipeline_mode = #tpu.pipeline_mode<synchronous>, transform_indices = @transform_2, window_bounds = array<i64: 128, 1>}, {pipeline_mode = #tpu.pipeline_mode<synchronous>, transform_indices = @transform_3, window_bounds = array<i64: 3, 128>}, {pipeline_mode = #tpu.pipeline_mode<synchronous>, transform_indices = @transform_4, window_bounds = array<i64: 3, 1>}, {transform_indices = @transform_5, window_bounds = array<i64: 1, 3, 256>}]} {
    %c0 = arith.constant 0 : index
    %c0_0 = arith.constant 0 : index
    %c0_1 = arith.constant 0 : index
    %0 = vector.load %arg2[%c0, %c0_0, %c0_1] : memref<1x6x256xf32, #tpu.memory_space<vmem>>, vector<1x6x256xf32>
    %1 = vector.shape_cast %0 : vector<1x6x256xf32> to vector<6x256xf32>
    %2 = arith.truncf %1 : vector<6x256xf32> to vector<6x256xbf16>
    %c0_2 = arith.constant 0 : index
    %c0_3 = arith.constant 0 : index
    %3 = vector.load %arg3[%c0_2, %c0_3] : memref<128x6xbf16, #tpu.memory_space<vmem>>, vector<128x6xbf16>
    %cst = arith.constant dense<0.000000e+00> : vector<128x256xf32>
    %4 = tpu.matmul %3, %2, %cst {dimension_numbers = #tpu.dot_dimension_numbers<[1], [0], [0], [1], [0, 0, 1, 1], [], []>} : vector<128x6xbf16>, vector<6x256xbf16>, vector<128x256xf32> -> vector<128x256xf32>
    %c0_4 = arith.constant 0 : index
    %c0_5 = arith.constant 0 : index
    %5 = vector.load %arg4[%c0_4, %c0_5] : memref<128x1xf32, #tpu.memory_space<vmem>>, vector<128x1xf32>
    %6 = vector.broadcast %5 : vector<128x1xf32> to vector<128x256xf32>
    %7 = arith.addf %4, %6 : vector<128x256xf32>
    %cst_6 = arith.constant 0.000000e+00 : f32
    %8 = vector.broadcast %cst_6 : f32 to vector<128x256xf32>
    %9 = arith.maximumf %7, %8 : vector<128x256xf32>
    %c0_7 = arith.constant 0 : index
    %c0_8 = arith.constant 0 : index
    %10 = vector.load %arg5[%c0_7, %c0_8] : memref<3x128xbf16, #tpu.memory_space<vmem>>, vector<3x128xbf16>
    %11 = arith.truncf %9 : vector<128x256xf32> to vector<128x256xbf16>
    %cst_9 = arith.constant dense<0.000000e+00> : vector<3x256xf32>
    %12 = tpu.matmul %10, %11, %cst_9 {dimension_numbers = #tpu.dot_dimension_numbers<[1], [0], [0], [1], [0, 0, 1, 1], [], []>} : vector<3x128xbf16>, vector<128x256xbf16>, vector<3x256xf32> -> vector<3x256xf32>
    %c0_10 = arith.constant 0 : index
    %c0_11 = arith.constant 0 : index
    %13 = vector.load %arg6[%c0_10, %c0_11] : memref<3x1xf32, #tpu.memory_space<vmem>>, vector<3x1xf32>
    %14 = vector.broadcast %13 : vector<3x1xf32> to vector<3x256xf32>
    %15 = arith.addf %12, %14 : vector<3x256xf32>
    %16 = arith.negf %15 : vector<3x256xf32>
    %17 = math.exp %16 : vector<3x256xf32>
    %cst_12 = arith.constant 1.000000e+00 : f32
    %18 = vector.broadcast %cst_12 : f32 to vector<3x256xf32>
    %19 = arith.addf %18, %17 : vector<3x256xf32>
    %20 = arith.divf %18, %19 : vector<3x256xf32>
    %c0_13 = arith.constant 0 : index
    %c0_14 = arith.constant 0 : index
    %c0_15 = arith.constant 0 : index
    %21 = vector.load %arg7[%c0_13, %c0_14, %c0_15] : memref<1x3x256xf32, #tpu.memory_space<vmem>>, vector<1x3x256xf32>
    %22 = vector.shape_cast %21 : vector<1x3x256xf32> to vector<3x256xf32>
    %23 = vector.shape_cast %20 : vector<3x256xf32> to vector<1x3x256xf32>
    tpu.vector_store %arg7[%c0_13, %c0_14, %c0_15], %23 {strides = array<i32>} : memref<1x3x256xf32, #tpu.memory_space<vmem>>, vector<1x3x256xf32>,
    return
  }
  func.func @transform_0(%arg0: i32, %arg1: i32) -> (i32, i32, i32) {
    %c0_i32 = arith.constant 0 : i32
    %c0_i32_0 = arith.constant 0 : i32
    return %arg0, %c0_i32, %arg1 : i32, i32, i32
  }
  func.func @transform_1(%arg0: i32, %arg1: i32) -> (i32, i32) {
    %c0_i32 = arith.constant 0 : i32
    %c0_i32_0 = arith.constant 0 : i32
    %c0_i32_1 = arith.constant 0 : i32
    return %c0_i32, %c0_i32_0 : i32, i32
  }
  func.func @transform_2(%arg0: i32, %arg1: i32) -> (i32, i32) {
    %c0_i32 = arith.constant 0 : i32
    %c0_i32_0 = arith.constant 0 : i32
    %c0_i32_1 = arith.constant 0 : i32
    return %c0_i32, %c0_i32_0 : i32, i32
  }
  func.func @transform_3(%arg0: i32, %arg1: i32) -> (i32, i32) {
    %c0_i32 = arith.constant 0 : i32
    %c0_i32_0 = arith.constant 0 : i32
    %c0_i32_1 = arith.constant 0 : i32
    return %c0_i32, %c0_i32_0 : i32, i32
  }
  func.func @transform_4(%arg0: i32, %arg1: i32) -> (i32, i32) {
    %c0_i32 = arith.constant 0 : i32
    %c0_i32_0 = arith.constant 0 : i32
    %c0_i32_1 = arith.constant 0 : i32
    return %c0_i32, %c0_i32_0 : i32, i32
  }
  func.func @transform_5(%arg0: i32, %arg1: i32) -> (i32, i32, i32) {
    %c0_i32 = arith.constant 0 : i32
    %c0_i32_0 = arith.constant 0 : i32
    return %arg0, %c0_i32, %arg1 : i32, i32, i32
  }
}

</mosaic_0001>

<llo_original>
// kernel: tpu_custom_call.1
$region0: #{tpu_custom_call.1}
  #allocation0 [shape = 'u32[]', space=smem, size = 0x4, offset = 0x4, fixed_abs, tag = 'smem constant byte address 0x4 - core index']
  #allocation1 [shape = 'u32[144,128]{1,0:T(1,128)}', space=vmem, size = 0x12000, scoped, tag = 'internal scratch']
  %s0 = inlined_call_operand.vmem [shape: f32[2,6,256], index: 0, kind: input, shape index: {}]
  %s1 = inlined_call_operand.vmem [shape: bf16[128,6], index: 1, kind: input, shape index: {}]
  %s2 = inlined_call_operand.vmem [shape: f32[128,1], index: 2, kind: input, shape index: {}]
  %s3 = inlined_call_operand.vmem [shape: bf16[3,128], index: 3, kind: input, shape index: {}]
  %s4 = inlined_call_operand.vmem [shape: f32[3,1], index: 4, kind: input, shape index: {}]
  %s5 = inlined_call_operand.vmem [shape: f32[2,3,256], index: 5, kind: output, shape index: {}]
  %s6 = sld [smem:[#allocation0]]
  $region53: #{tpu_custom_call.1} parent=0
    _
  %s8 = ssub.s32 1, %s6
  %s9 = scalar_select 0, %s8, %s6
  loop: start=0, step=1, limit=4
  $region2: #{tpu_custom_call.1} parent=0 // loop_pre_header
    _
  $region3: #{tpu_custom_call.1} parent=0 // loop_header
    %s11 = sphi 0, %s15
    %p12 = scmp.ge.s32.totalorder %s11, 4
    %s18 = sphi 0, %s30
    %s19 = sphi 0, %s26
    %s20 = sphi 0, %s18
    %s21 = sphi 0, %s19
    %s22 = sphi 0, %s20
    %s23 = sphi 0, %s21
    %s35 = sphi 0, %s37
    %s38 = sphi 0, %s35
    %s39 = sphi 0, %s38
    %s55 = sphi 0, %s39
    %s59 = sphi 0, %s59
    %s61 = sphi 0, %s59
    %s62 = sphi 0, %s61
    %s76 = sphi 0, %s62
    %s80 = sphi 0, %s80
    %s82 = sphi 0, %s80
    %s83 = sphi 0, %s82
    %s97 = sphi 0, %s83
    %s101 = sphi 0, %s101
    %s103 = sphi 0, %s101
    %s104 = sphi 0, %s103
    %s118 = sphi 0, %s104
    %s122 = sphi 0, %s122
    %s124 = sphi 0, %s122
    %s125 = sphi 0, %s124
    %s139 = sphi 0, %s125
    %s147 = sphi 0, %s149
    %s150 = sphi 0, %s147
    %s151 = sphi 0, %s150
    %s167 = sphi 0, %s151
  $region4: #{tpu_custom_call.1} parent=0 // loop_header_branch
    %14 = sbr.rel (%p12) target = $region8
  $region5: #{tpu_custom_call.1} parent=0 // loop_body
    %s16 = ssub.s32 %s11, 1
    %s17 = ssub.s32 %s11, 2
    %s24 = sadd.s32 1, %s19
    %p25 = scmp.ge.s32.totalorder %s24, 1
    %s26 = scalar_select %p25, 0, %s24
    %s27 = sadd.s32 1, %s18
    %s28 = scalar_select %p25, %s27, %s18
    %p29 = scmp.ge.s32.totalorder %s28, 2
    %s30 = scalar_select %p29, 0, %s28
    %s31 = ssub.s32 %s18, %s30
    %s32 = ssub.s32 %s19, %s26
    %s33 = sor.u32 %s31, %s32
    %p34 = scmp.eq.s32.totalorder %s33, 0
    %s36 = sadd.s32 %s35, 1
    %s37 = scalar_select %p34, %s35, %s36
    %p40 = pneg %p34
    %p41 = scmp.eq.s32.totalorder %s11, 1
    %p42 = por %p40, %p41
    %p43 = scmp.ne.s32.totalorder %s35, %s38
    %p44 = scmp.eq.s32.totalorder %s11, 0
    %p45 = por %p43, %p44
    %p46 = scmp.ne.s32.totalorder %s35, %s38
    %p47 = scmp.eq.s32.totalorder %s16, 1
    %p48 = por %p46, %p47
    %p49 = scmp.ne.s32.totalorder %s38, %s39
    %p50 = scmp.eq.s32.totalorder %s16, 0
    %p51 = por %p49, %p50
    %p52 = scmp.ne.s32.totalorder %s38, %s39
    %p53 = scmp.eq.s32.totalorder %s17, 1
    %p54 = por %p52, %p53
    %p56 = scmp.ne.s32.totalorder %s39, %s55
    %p57 = scmp.eq.s32.totalorder %s17, 0
    %p58 = por %p56, %p57
    %s60 = sadd.s32 %s59, 1
    %p63 = scmp.eq.s32.totalorder %s11, 1
    %p64 = scmp.ne.s32.totalorder %s59, %s61
    %p65 = scmp.eq.s32.totalorder %s11, 0
    %p66 = por %p64, %p65
    %p67 = scmp.ne.s32.totalorder %s59, %s61
    %p68 = scmp.eq.s32.totalorder %s16, 1
    %p69 = por %p67, %p68
    %p70 = scmp.ne.s32.totalorder %s61, %s62
    %p71 = scmp.eq.s32.totalorder %s16, 0
    %p72 = por %p70, %p71
    %p73 = scmp.ne.s32.totalorder %s61, %s62
    %p74 = scmp.eq.s32.totalorder %s17, 1
    %p75 = por %p73, %p74
    %p77 = scmp.ne.s32.totalorder %s62, %s76
    %p78 = scmp.eq.s32.totalorder %s17, 0
    %p79 = por %p77, %p78
    %s81 = sadd.s32 %s80, 1
    %p84 = scmp.eq.s32.totalorder %s11, 1
    %p85 = scmp.ne.s32.totalorder %s80, %s82
    %p86 = scmp.eq.s32.totalorder %s11, 0
    %p87 = por %p85, %p86
    %p88 = scmp.ne.s32.totalorder %s80, %s82
    %p89 = scmp.eq.s32.totalorder %s16, 1
    %p90 = por %p88, %p89
    %p91 = scmp.ne.s32.totalorder %s82, %s83
    %p92 = scmp.eq.s32.totalorder %s16, 0
    %p93 = por %p91, %p92
    %p94 = scmp.ne.s32.totalorder %s82, %s83
    %p95 = scmp.eq.s32.totalorder %s17, 1
    %p96 = por %p94, %p95
    %p98 = scmp.ne.s32.totalorder %s83, %s97
    %p99 = scmp.eq.s32.totalorder %s17, 0
    %p100 = por %p98, %p99
    %s102 = sadd.s32 %s101, 1
    %p105 = scmp.eq.s32.totalorder %s11, 1
    %p106 = scmp.ne.s32.totalorder %s101, %s103
    %p107 = scmp.eq.s32.totalorder %s11, 0
    %p108 = por %p106, %p107
    %p109 = scmp.ne.s32.totalorder %s101, %s103
    %p110 = scmp.eq.s32.totalorder %s16, 1
    %p111 = por %p109, %p110
    %p112 = scmp.ne.s32.totalorder %s103, %s104
    %p113 = scmp.eq.s32.totalorder %s16, 0
    %p114 = por %p112, %p113
    %p115 = scmp.ne.s32.totalorder %s103, %s104
    %p116 = scmp.eq.s32.totalorder %s17, 1
    %p117 = por %p115, %p116
    %p119 = scmp.ne.s32.totalorder %s104, %s118
    %p120 = scmp.eq.s32.totalorder %s17, 0
    %p121 = por %p119, %p120
    %s123 = sadd.s32 %s122, 1
    %p126 = scmp.eq.s32.totalorder %s11, 1
    %p127 = scmp.ne.s32.totalorder %s122, %s124
    %p128 = scmp.eq.s32.totalorder %s11, 0
    %p129 = por %p127, %p128
    %p130 = scmp.ne.s32.totalorder %s122, %s124
    %p131 = scmp.eq.s32.totalorder %s16, 1
    %p132 = por %p130, %p131
    %p133 = scmp.ne.s32.totalorder %s124, %s125
    %p134 = scmp.eq.s32.totalorder %s16, 0
    %p135 = por %p133, %p134
    %p136 = scmp.ne.s32.totalorder %s124, %s125
    %p137 = scmp.eq.s32.totalorder %s17, 1
    %p138 = por %p136, %p137
    %p140 = scmp.ne.s32.totalorder %s125, %s139
    %p141 = scmp.eq.s32.totalorder %s17, 0
    %p142 = por %p140, %p141
    %s143 = ssub.s32 %s18, %s30
    %s144 = ssub.s32 %s19, %s26
    %s145 = sor.u32 %s143, %s144
    %p146 = scmp.eq.s32.totalorder %s145, 0
    %s148 = sadd.s32 %s147, 1
    %s149 = scalar_select %p146, %s147, %s148
    %p152 = pneg %p146
    %p153 = scmp.eq.s32.totalorder %s11, 1
    %p154 = por %p152, %p153
    %p155 = scmp.ne.s32.totalorder %s147, %s150
    %p156 = scmp.eq.s32.totalorder %s11, 0
    %p157 = por %p155, %p156
    %p158 = scmp.ne.s32.totalorder %s147, %s150
    %p159 = scmp.eq.s32.totalorder %s16, 1
    %p160 = por %p158, %p159
    %p161 = scmp.ne.s32.totalorder %s150, %s151
    %p162 = scmp.eq.s32.totalorder %s16, 0
    %p163 = por %p161, %p162
    %p164 = scmp.ne.s32.totalorder %s150, %s151
    %p165 = scmp.eq.s32.totalorder %s17, 1
    %p166 = por %p164, %p165
    %p168 = scmp.ne.s32.totalorder %s151, %s167
    %p169 = scmp.eq.s32.totalorder %s17, 0
    %p170 = por %p168, %p169
    %p171 = scmp.le.s32.totalorder 1, %s11
    %p172 = scmp.lt.s32.totalorder %s11, 3
    %p173 = pnand %p171, %p172
    %p174 = pneg %p173
    // Predicated region
    $region9: #{tpu_custom_call.1} parent=5 // pred_check
      _
    $region10: #{tpu_custom_call.1} parent=5 // pred_check_branch
      %176 = sbr.rel (%p173) target = $region12
    $region11: #{tpu_custom_call.1} parent=5 // pred_region
      %s177 = ssub.s32 %s11, 1
      // Predicated region
      $region13: #{tpu_custom_call.1} parent=11 // pred_check
        %p178 = pneg %p72
      $region14: #{tpu_custom_call.1} parent=11 // pred_check_branch
        %180 = sbr.rel (%p178) target = $region16
      $region15: #{tpu_custom_call.1} parent=11 // pred_region
        _
      $region16: #{tpu_custom_call.1} parent=11 // pred_fallthru
        _
      // Predicated region
      $region17: #{tpu_custom_call.1} parent=11 // pred_check
        %p181 = pneg %p93
      $region18: #{tpu_custom_call.1} parent=11 // pred_check_branch
        %183 = sbr.rel (%p181) target = $region20
      $region19: #{tpu_custom_call.1} parent=11 // pred_region
        _
      $region20: #{tpu_custom_call.1} parent=11 // pred_fallthru
        _
      // Predicated region
      $region21: #{tpu_custom_call.1} parent=11 // pred_check
        %p184 = pneg %p114
      $region22: #{tpu_custom_call.1} parent=11 // pred_check_branch
        %186 = sbr.rel (%p184) target = $region24
      $region23: #{tpu_custom_call.1} parent=11 // pred_region
        _
      $region24: #{tpu_custom_call.1} parent=11 // pred_fallthru
        _
      // Predicated region
      $region25: #{tpu_custom_call.1} parent=11 // pred_check
        %p187 = pneg %p135
      $region26: #{tpu_custom_call.1} parent=11 // pred_check_branch
        %189 = sbr.rel (%p187) target = $region28
      $region27: #{tpu_custom_call.1} parent=11 // pred_region
        _
      $region28: #{tpu_custom_call.1} parent=11 // pred_fallthru
        _
    $region12: #{tpu_custom_call.1} parent=5 // pred_fallthru
      _
    %p190 = scmp.lt.s32.totalorder %s11, 2
    // Predicated region
    $region29: #{tpu_custom_call.1} parent=5 // pred_check
      %p191 = pneg %p190
    $region30: #{tpu_custom_call.1} parent=5 // pred_check_branch
      %193 = sbr.rel (%p191) target = $region32
    $region31: #{tpu_custom_call.1} parent=5 // pred_region
      // Predicated region
      $region33: #{tpu_custom_call.1} parent=31 // pred_check
        %p194 = pneg %p45
      $region34: #{tpu_custom_call.1} parent=31 // pred_check_branch
        %196 = sbr.rel (%p194) target = $region36
      $region35: #{tpu_custom_call.1} parent=31 // pred_region
        %s197 = smul.u32 2, %s19
        %p198 = scmp.lt.s32.totalorder %s18, 1
        %s199 = scalar_select %p198, %s18, 1
        %p200 = scmp.lt.s32.totalorder %s197, 1
        %s201 = scalar_select %p200, %s197, 1
        %s202 = smul.addr %s199, 2
        %s203 = sadd.s32 %s201, %s202
        %s204 = smul.addr %s203, 8
        %s205 = scalar_lea.vmem %s0, %s204
        %s206 = smul.u32 2, %s19
      $region36: #{tpu_custom_call.1} parent=31 // pred_fallthru
        _
    $region32: #{tpu_custom_call.1} parent=5 // pred_fallthru
      _
    %p207 = scmp.le.s32.totalorder 1, %s11
    %p208 = scmp.lt.s32.totalorder %s11, 3
    %p209 = pnand %p207, %p208
    %p210 = pneg %p209
    // Predicated region
    $region37: #{tpu_custom_call.1} parent=5 // pred_check
      _
    $region38: #{tpu_custom_call.1} parent=5 // pred_check_branch
      %212 = sbr.rel (%p209) target = $region40
    $region39: #{tpu_custom_call.1} parent=5 // pred_region
      %s213 = ssub.s32 %s11, 1
      %s214 = smul.u32 2, %s21
      %p215 = scmp.lt.s32.totalorder %s20, 1
      %s216 = scalar_select %p215, %s20, 1
      %p217 = scmp.lt.s32.totalorder %s214, 1
      %s218 = scalar_select %p217, %s214, 1
      %s219 = smul.addr %s216, 2
      %s220 = sadd.s32 %s218, %s219
      %s221 = smul.addr %s220, 8
      %s222 = scalar_lea.vmem %s0, %s221
      %p223 = pneg %p51
      %p224 = pneg %p48
      %p225 = pneg %p72
      %p226 = pneg %p69
      %p227 = pneg %p93
      %p228 = pneg %p90
      %p229 = pneg %p114
      %p230 = pneg %p111
      %p231 = pneg %p135
      %p232 = pneg %p132
      %p233 = pneg %p163
      %p234 = pneg %p160
      %s235 = smul.u32 2, %s21
      %p236 = scmp.lt.s32.totalorder %s20, 1
      %s237 = scalar_select %p236, %s20, 1
      %p238 = scmp.lt.s32.totalorder %s235, 1
      %s239 = scalar_select %p238, %s235, 1
      %s240 = smul.addr %s237, 2
      %s241 = sadd.s32 %s239, %s240
      %s242 = smul.addr %s241, 4
      %s243 = scalar_lea.vmem %s5, %s242
      %s244 = smul.u32 2, %s21
      %p245 = scmp.lt.s32.totalorder %s20, 1
      %s246 = scalar_select %p245, %s20, 1
      %p247 = scmp.lt.s32.totalorder %s244, 1
      %s248 = scalar_select %p247, %s244, 1
      %s249 = smul.addr %s246, 2
      %s250 = sadd.s32 %s248, %s249
      %s251 = smul.addr %s250, 8
      %s252 = scalar_lea.vmem %s0, %s251
      %s253 = smul.u32 2, %s21
      %s254 = smul.u32 2, %s21
      %p255 = scmp.lt.s32.totalorder %s20, 1
      %s256 = scalar_select %p255, %s20, 1
      %p257 = scmp.lt.s32.totalorder %s254, 1
      %s258 = scalar_select %p257, %s254, 1
      %s259 = smul.addr %s256, 2
      %s260 = sadd.s32 %s258, %s259
      %s261 = smul.addr %s260, 4
      %s262 = scalar_lea.vmem %s5, %s261
      %s263 = smul.u32 2, %s21
      %v265 = vld [vmem:[%s252] sm:$0x3f]
      %v266 = vld [vmem:[%s252 + $0x8] sm:$0x3f]
      %v267 = vpack.c.bf16 %v265, %v265
      %v268 = vpack.c.bf16 %v266, %v266
      %v269 = vld [vmem:[%s1] sm:$0xf]
      %v270 = vld [vmem:[%s1 + $0x4] sm:$0xf]
      %v271 = vld [vmem:[%s1 + $0x8] sm:$0xf]
      %v272 = vld [vmem:[%s1 + $0xc] sm:$0xf]
      %v273 = vld [vmem:[%s1 + $0x10] sm:$0xf]
      %v274 = vld [vmem:[%s1 + $0x14] sm:$0xf]
      %v275 = vld [vmem:[%s1 + $0x18] sm:$0xf]
      %v276 = vld [vmem:[%s1 + $0x1c] sm:$0xf]
      %v277 = vld [vmem:[%s1 + $0x20] sm:$0xf]
      %v278 = vld [vmem:[%s1 + $0x24] sm:$0xf]
      %v279 = vld [vmem:[%s1 + $0x28] sm:$0xf]
      %v280 = vld [vmem:[%s1 + $0x2c] sm:$0xf]
      %v281 = vld [vmem:[%s1 + $0x30] sm:$0xf]
      %v282 = vld [vmem:[%s1 + $0x34] sm:$0xf]
      %v283 = vld [vmem:[%s1 + $0x38] sm:$0xf]
      %v284 = vld [vmem:[%s1 + $0x3c] sm:$0xf]
      %v285 = vld [vmem:[%s2] sm:$0xff]
      %v286 = vld [vmem:[%s2 + $0x8] sm:$0xff]
      %v287 = vld [vmem:[%s2 + $0x10] sm:$0xff]
      %v288 = vld [vmem:[%s2 + $0x18] sm:$0xff]
      %v289 = vld [vmem:[%s2 + $0x20] sm:$0xff]
      %v290 = vld [vmem:[%s2 + $0x28] sm:$0xff]
      %v291 = vld [vmem:[%s2 + $0x30] sm:$0xff]
      %v292 = vld [vmem:[%s2 + $0x38] sm:$0xff]
      %v293 = vld [vmem:[%s2 + $0x40] sm:$0xff]
      %v294 = vld [vmem:[%s2 + $0x48] sm:$0xff]
      %v295 = vld [vmem:[%s2 + $0x50] sm:$0xff]
      %v296 = vld [vmem:[%s2 + $0x58] sm:$0xff]
      %v297 = vld [vmem:[%s2 + $0x60] sm:$0xff]
      %v298 = vld [vmem:[%s2 + $0x68] sm:$0xff]
      %v299 = vld [vmem:[%s2 + $0x70] sm:$0xff]
      %v300 = vld [vmem:[%s2 + $0x78] sm:$0xff]
      %302 = vset.pattern.permute.xlu0 0
      %303 = vperm.xlu0 %302, %v285
      %v304 = vpop.permute.xlu0 %303
      %307 = vset.pattern.permute.xlu0 0
      %308 = vperm.xlu0 %307, %v286
      %v309 = vpop.permute.xlu0 %308
      %312 = vset.pattern.permute.xlu0 0
      %313 = vperm.xlu0 %312, %v287
      %v314 = vpop.permute.xlu0 %313
      %317 = vset.pattern.permute.xlu0 0
      %318 = vperm.xlu0 %317, %v288
      %v319 = vpop.permute.xlu0 %318
      %322 = vset.pattern.permute.xlu0 0
      %323 = vperm.xlu0 %322, %v289
      %v324 = vpop.permute.xlu0 %323
      %327 = vset.pattern.permute.xlu0 0
      %328 = vperm.xlu0 %327, %v290
      %v329 = vpop.permute.xlu0 %328
      %332 = vset.pattern.permute.xlu0 0
      %333 = vperm.xlu0 %332, %v291
      %v334 = vpop.permute.xlu0 %333
      %337 = vset.pattern.permute.xlu0 0
      %338 = vperm.xlu0 %337, %v292
      %v339 = vpop.permute.xlu0 %338
      %342 = vset.pattern.permute.xlu0 0
      %343 = vperm.xlu0 %342, %v293
      %v344 = vpop.permute.xlu0 %343
      %347 = vset.pattern.permute.xlu0 0
      %348 = vperm.xlu0 %347, %v294
      %v349 = vpop.permute.xlu0 %348
      %352 = vset.pattern.permute.xlu0 0
      %353 = vperm.xlu0 %352, %v295
      %v354 = vpop.permute.xlu0 %353
      %357 = vset.pattern.permute.xlu0 0
      %358 = vperm.xlu0 %357, %v296
      %v359 = vpop.permute.xlu0 %358
      %362 = vset.pattern.permute.xlu0 0
      %363 = vperm.xlu0 %362, %v297
      %v364 = vpop.permute.xlu0 %363
      %367 = vset.pattern.permute.xlu0 0
      %368 = vperm.xlu0 %367, %v298
      %v369 = vpop.permute.xlu0 %368
      %372 = vset.pattern.permute.xlu0 0
      %373 = vperm.xlu0 %372, %v299
      %v374 = vpop.permute.xlu0 %373
      %377 = vset.pattern.permute.xlu0 0
      %378 = vperm.xlu0 %377, %v300
      %v379 = vpop.permute.xlu0 %378
      %v397 = vunpack.c.l.b16 %v269
      %v398 = vunpack.c.l.b16 %v270
      %v399 = vunpack.c.l.b16 %v271
      %v400 = vunpack.c.l.b16 %v272
      %v401 = vunpack.c.l.b16 %v273
      %v402 = vunpack.c.l.b16 %v274
      %v403 = vunpack.c.l.b16 %v275
      %v404 = vunpack.c.l.b16 %v276
      %v405 = vunpack.c.l.b16 %v277
      %v406 = vunpack.c.l.b16 %v278
      %v407 = vunpack.c.l.b16 %v279
      %v408 = vunpack.c.l.b16 %v280
      %v409 = vunpack.c.l.b16 %v281
      %v410 = vunpack.c.l.b16 %v282
      %v411 = vunpack.c.l.b16 %v283
      %v412 = vunpack.c.l.b16 %v284
      %v413 = vpack.c.b16 %v398, %v397
      %v414 = vpack.c.b16 %v400, %v399
      %v415 = vpack.c.b16 %v402, %v401
      %v416 = vpack.c.b16 %v404, %v403
      %v417 = vpack.c.b16 %v406, %v405
      %v418 = vpack.c.b16 %v408, %v407
      %v419 = vpack.c.b16 %v410, %v409
      %v420 = vpack.c.b16 %v412, %v411
      %vm421 = vcmask 48128
      %v423 = vsel %vm421, %v413, 0
      %v426 = vsel %vm421, %v414, 0
      %v429 = vsel %vm421, %v415, 0
      %v432 = vsel %vm421, %v416, 0
      %v435 = vsel %vm421, %v417, 0
      %v438 = vsel %vm421, %v418, 0
      %v441 = vsel %vm421, %v419, 0
      %v444 = vsel %vm421, %v420, 0
      %vm446 = vcmask 1042432
      %v448 = vsel %vm446, %v267, 0
      %v451 = vsel %vm446, %v268, 0
      %453 = vmatprep.subr.bf16.mxu0 %v451
      %454 = vmatpush1.bf16.msra.mxu0 %v448
      %455 = vmatprep.subr.bf16.mxu0 0
      %456 = vmatpush1.bf16.msra.mxu0 0
      %457 = vmatprep.subr.bf16.mxu0 0
      %458 = vmatpush1.bf16.msra.mxu0 0
      %459 = vmatprep.subr.bf16.mxu0 0
      %460 = vmatpush1.bf16.msra.mxu0 0
      %461 = vmatprep.subr.bf16.mxu0 0
      %462 = vmatpush1.bf16.msra.mxu0 0
      %463 = vmatprep.subr.bf16.mxu0 0
      %464 = vmatpush1.bf16.msra.mxu0 0
      %465 = vmatprep.subr.bf16.mxu0 0
      %466 = vmatpush1.bf16.msra.mxu0 0
      %467 = vmatprep.subr.bf16.mxu0 0
      %468 = vmatpush1.bf16.msra.mxu0 0
      %469 = vmatprep.subr.bf16.mxu0 0
      %470 = vmatpush1.bf16.msra.mxu0 0
      %471 = vmatprep.subr.bf16.mxu0 0
      %472 = vmatpush1.bf16.msra.mxu0 0
      %473 = vmatprep.subr.bf16.mxu0 0
      %474 = vmatpush1.bf16.msra.mxu0 0
      %475 = vmatprep.subr.bf16.mxu0 0
      %476 = vmatpush1.bf16.msra.mxu0 0
      %477 = vmatprep.subr.bf16.mxu0 0
      %478 = vmatpush1.bf16.msra.mxu0 0
      %479 = vmatprep.subr.bf16.mxu0 0
      %480 = vmatpush1.bf16.msra.mxu0 0
      %481 = vmatprep.subr.bf16.mxu0 0
      %482 = vmatpush1.bf16.msra.mxu0 0
      %483 = vmatprep.subr.bf16.mxu0 0
      %484 = vmatpush1.bf16.msra.mxu0 0
      %485 = vmatprep.mubr.bf16.mxu0 0
      %486 = vmatmul.mubr.bf16.gmra.mrb[0].mxu0 %v423
      %v487 = vpop.f32.mrb[0].mxu0
      %v488 = vadd.f32 %v304, %v487
      %v489 = vpop.f32.mrb[0].mxu0
      %v490 = vadd.f32 %v304, %v489
      %v491 = vpop.f32.mrb[0].mxu0
      %v492 = vadd.f32 %v309, %v491
      %v493 = vpop.f32.mrb[0].mxu0
      %v494 = vadd.f32 %v309, %v493
      %495 = vmatprep.mubr.bf16.mxu0 0
      %496 = vmatmul.mubr.bf16.gmra.mrb[0].mxu0 %v426
      %v497 = vpop.f32.mrb[0].mxu0
      %v498 = vadd.f32 %v314, %v497
      %v499 = vpop.f32.mrb[0].mxu0
      %v500 = vadd.f32 %v314, %v499
      %v501 = vpop.f32.mrb[0].mxu0
      %v502 = vadd.f32 %v319, %v501
      %v503 = vpop.f32.mrb[0].mxu0
      %v504 = vadd.f32 %v319, %v503
      %505 = vmatprep.mubr.bf16.mxu0 0
      %506 = vmatmul.mubr.bf16.gmra.mrb[0].mxu0 %v429
      %v507 = vpop.f32.mrb[0].mxu0
      %v508 = vadd.f32 %v324, %v507
      %v509 = vpop.f32.mrb[0].mxu0
      %v510 = vadd.f32 %v324, %v509
      %v511 = vpop.f32.mrb[0].mxu0
      %v512 = vadd.f32 %v329, %v511
      %v513 = vpop.f32.mrb[0].mxu0
      %v514 = vadd.f32 %v329, %v513
      %515 = vmatprep.mubr.bf16.mxu0 0
      %516 = vmatmul.mubr.bf16.gmra.mrb[0].mxu0 %v432
      %v517 = vpop.f32.mrb[0].mxu0
      %v518 = vadd.f32 %v334, %v517
      %v519 = vpop.f32.mrb[0].mxu0
      %v520 = vadd.f32 %v334, %v519
      %v521 = vpop.f32.mrb[0].mxu0
      %v522 = vadd.f32 %v339, %v521
      %v523 = vpop.f32.mrb[0].mxu0
      %v524 = vadd.f32 %v339, %v523
      %525 = vmatprep.mubr.bf16.mxu0 0
      %526 = vmatmul.mubr.bf16.gmra.mrb[0].mxu0 %v435
      %v527 = vpop.f32.mrb[0].mxu0
      %v528 = vadd.f32 %v344, %v527
      %v529 = vpop.f32.mrb[0].mxu0
      %v530 = vadd.f32 %v344, %v529
      %v531 = vpop.f32.mrb[0].mxu0
      %v532 = vadd.f32 %v349, %v531
      %v533 = vpop.f32.mrb[0].mxu0
      %v534 = vadd.f32 %v349, %v533
      %535 = vmatprep.mubr.bf16.mxu0 0
      %536 = vmatmul.mubr.bf16.gmra.mrb[0].mxu0 %v438
      %v537 = vpop.f32.mrb[0].mxu0
      %v538 = vadd.f32 %v354, %v537
      %v539 = vpop.f32.mrb[0].mxu0
      %v540 = vadd.f32 %v354, %v539
      %v541 = vpop.f32.mrb[0].mxu0
      %v542 = vadd.f32 %v359, %v541
      %v543 = vpop.f32.mrb[0].mxu0
      %v544 = vadd.f32 %v359, %v543
      %545 = vmatprep.mubr.bf16.mxu0 0
      %546 = vmatmul.mubr.bf16.gmra.mrb[0].mxu0 %v441
      %v547 = vpop.f32.mrb[0].mxu0
      %v548 = vadd.f32 %v364, %v547
      %v549 = vpop.f32.mrb[0].mxu0
      %v550 = vadd.f32 %v364, %v549
      %v551 = vpop.f32.mrb[0].mxu0
      %v552 = vadd.f32 %v369, %v551
      %v553 = vpop.f32.mrb[0].mxu0
      %v554 = vadd.f32 %v369, %v553
      %555 = vmatprep.mubr.bf16.mxu0 0
      %556 = vmatmul.mubr.bf16.gmra.mrb[0].mxu0 %v444
      %v557 = vpop.f32.mrb[0].mxu0
      %v558 = vadd.f32 %v374, %v557
      %v559 = vpop.f32.mrb[0].mxu0
      %v560 = vadd.f32 %v374, %v559
      %v561 = vpop.f32.mrb[0].mxu0
      %v562 = vadd.f32 %v379, %v561
      %v563 = vpop.f32.mrb[0].mxu0
      %v564 = vadd.f32 %v379, %v563
      %565 = vdwg.mxu0
      %v566 = vmax.f32 %v488, 0.0
      %v567 = vmax.f32 %v490, 0.0
      %v568 = vmax.f32 %v492, 0.0
      %v569 = vmax.f32 %v494, 0.0
      %v570 = vmax.f32 %v498, 0.0
      %v571 = vmax.f32 %v500, 0.0
      %v572 = vmax.f32 %v502, 0.0
      %v573 = vmax.f32 %v504, 0.0
      %v574 = vmax.f32 %v508, 0.0
      %v575 = vmax.f32 %v510, 0.0
      %v576 = vmax.f32 %v512, 0.0
      %v577 = vmax.f32 %v514, 0.0
      %v578 = vmax.f32 %v518, 0.0
      %v579 = vmax.f32 %v520, 0.0
      %v580 = vmax.f32 %v522, 0.0
      %v581 = vmax.f32 %v524, 0.0
      %v582 = vmax.f32 %v528, 0.0
      %v583 = vmax.f32 %v530, 0.0
      %v584 = vmax.f32 %v532, 0.0
      %v585 = vmax.f32 %v534, 0.0
      %v586 = vmax.f32 %v538, 0.0
      %v587 = vmax.f32 %v540, 0.0
      %v588 = vmax.f32 %v542, 0.0
      %v589 = vmax.f32 %v544, 0.0
      %v590 = vmax.f32 %v548, 0.0
      %v591 = vmax.f32 %v550, 0.0
      %v592 = vmax.f32 %v552, 0.0
      %v593 = vmax.f32 %v554, 0.0
      %v594 = vmax.f32 %v558, 0.0
      %v595 = vmax.f32 %v560, 0.0
      %v596 = vmax.f32 %v562, 0.0
      %v597 = vmax.f32 %v564, 0.0
      %v598 = vld [vmem:[%s3] sm:$0x3]
      %v599 = vpack.c.bf16 %v568, %v566
      %v600 = vpack.c.bf16 %v569, %v567
      %v601 = vpack.c.bf16 %v572, %v570
      %v602 = vpack.c.bf16 %v573, %v571
      %v603 = vpack.c.bf16 %v576, %v574
      %v604 = vpack.c.bf16 %v577, %v575
      %v605 = vpack.c.bf16 %v580, %v578
      %v606 = vpack.c.bf16 %v581, %v579
      %v607 = vpack.c.bf16 %v584, %v582
      %v608 = vpack.c.bf16 %v585, %v583
      %v609 = vpack.c.bf16 %v588, %v586
      %v610 = vpack.c.bf16 %v589, %v587
      %v611 = vpack.c.bf16 %v592, %v590
      %v612 = vpack.c.bf16 %v593, %v591
      %v613 = vpack.c.bf16 %v596, %v594
      %v614 = vpack.c.bf16 %v597, %v595
      %v615 = vld [vmem:[%s4] sm:$0x7]
      %617 = vset.pattern.permute.xlu0 0
      %618 = vperm.xlu0 %617, %v615
      %v619 = vpop.permute.xlu0 %618
      %621 = vmatprep.subr.bf16.mxu0 %v600
      %622 = vmatpush1.bf16.msra.mxu0 %v599
      %623 = vmatprep.subr.bf16.mxu0 %v602
      %624 = vmatpush1.bf16.msra.mxu0 %v601
      %625 = vmatprep.subr.bf16.mxu0 %v604
      %626 = vmatpush1.bf16.msra.mxu0 %v603
      %627 = vmatprep.subr.bf16.mxu0 %v606
      %628 = vmatpush1.bf16.msra.mxu0 %v605
      %629 = vmatprep.subr.bf16.mxu0 %v608
      %630 = vmatpush1.bf16.msra.mxu0 %v607
      %631 = vmatprep.subr.bf16.mxu0 %v610
      %632 = vmatpush1.bf16.msra.mxu0 %v609
      %633 = vmatprep.subr.bf16.mxu0 %v612
      %634 = vmatpush1.bf16.msra.mxu0 %v611
      %635 = vmatprep.subr.bf16.mxu0 %v614
      %636 = vmatpush1.bf16.msra.mxu0 %v613
      %637 = vmatprep.subr.bf16.mxu0 0
      %638 = vmatpush1.bf16.msra.mxu0 0
      %639 = vmatprep.subr.bf16.mxu0 0
      %640 = vmatpush1.bf16.msra.mxu0 0
      %641 = vmatprep.subr.bf16.mxu0 0
      %642 = vmatpush1.bf16.msra.mxu0 0
      %643 = vmatprep.subr.bf16.mxu0 0
      %644 = vmatpush1.bf16.msra.mxu0 0
      %645 = vmatprep.subr.bf16.mxu0 0
      %646 = vmatpush1.bf16.msra.mxu0 0
      %647 = vmatprep.subr.bf16.mxu0 0
      %648 = vmatpush1.bf16.msra.mxu0 0
      %649 = vmatprep.subr.bf16.mxu0 0
      %650 = vmatpush1.bf16.msra.mxu0 0
      %651 = vmatprep.subr.bf16.mxu0 0
      %652 = vmatpush1.bf16.msra.mxu0 0
      %653 = vmatprep.mubr.bf16.mxu0 0
      %654 = vmatmul.mubr.bf16.gmra.mrb[0].mxu0 %v598
      %v655 = vpop.f32.mrb[0].mxu0
      %v656 = vadd.f32 %v619, %v655
      %v657 = vpop.f32.mrb[0].mxu0
      %v658 = vadd.f32 %v619, %v657
      %v659 = vpop.f32.mrb[0].mxu0
      %v660 = vpop.f32.mrb[0].mxu0
      %661 = vdwg.mxu0
      %v662 = vxor.u32 %v656, 2147483648
      %v663 = vxor.u32 %v658, 2147483648
      %v664 = vmul.f32 %v662, 1.442695
      %v665 = vpow.pop %v664
      %v666 = vmul.f32 %v663, 1.442695
      %v667 = vpow.pop %v666
      %v668 = vadd.f32 %v665, 1.0
      %v669 = vadd.f32 %v667, 1.0
      %v670 = vrcp.pop %v668
      %v671 = vmul.f32 1.0, %v670
      %v672 = vrcp.pop %v669
      %v673 = vmul.f32 1.0, %v672
      %v676 = vcombine.low %v671, %v673
      %678 = vst [vmem:[%s262] sm:$0x77] %v676
      %s679 = smul.u32 2, %s21
      %p680 = scmp.lt.s32.totalorder %s20, 1
      %s681 = scalar_select %p680, %s20, 1
      %p682 = scmp.lt.s32.totalorder %s679, 1
      %s683 = scalar_select %p682, %s679, 1
      %s684 = smul.addr %s681, 2
      %s685 = sadd.s32 %s683, %s684
      %s686 = smul.addr %s685, 4
      %s687 = scalar_lea.vmem %s5, %s686
      // Predicated region
      $region41: #{tpu_custom_call.1} parent=39 // pred_check
        %p688 = pneg %p160
      $region42: #{tpu_custom_call.1} parent=39 // pred_check_branch
        %690 = sbr.rel (%p688) target = $region44
      $region43: #{tpu_custom_call.1} parent=39 // pred_region
        %s691 = smul.u32 2, %s21
      $region44: #{tpu_custom_call.1} parent=39 // pred_fallthru
        _
    $region40: #{tpu_custom_call.1} parent=5 // pred_fallthru
      _
    %p692 = scmp.le.s32.totalorder 2, %s11
    // Predicated region
    $region45: #{tpu_custom_call.1} parent=5 // pred_check
      %p693 = pneg %p692
    $region46: #{tpu_custom_call.1} parent=5 // pred_check_branch
      %695 = sbr.rel (%p693) target = $region48
    $region47: #{tpu_custom_call.1} parent=5 // pred_region
      %s696 = ssub.s32 %s11, 2
      // Predicated region
      $region49: #{tpu_custom_call.1} parent=47 // pred_check
        %p697 = pneg %p166
      $region50: #{tpu_custom_call.1} parent=47 // pred_check_branch
        %699 = sbr.rel (%p697) target = $region52
      $region51: #{tpu_custom_call.1} parent=47 // pred_region
        %s700 = smul.u32 2, %s23
        %p701 = scmp.lt.s32.totalorder %s22, 1
        %s702 = scalar_select %p701, %s22, 1
        %p703 = scmp.lt.s32.totalorder %s700, 1
        %s704 = scalar_select %p703, %s700, 1
        %s705 = smul.addr %s702, 2
        %s706 = sadd.s32 %s704, %s705
        %s707 = smul.addr %s706, 4
        %s708 = scalar_lea.vmem %s5, %s707
      $region52: #{tpu_custom_call.1} parent=47 // pred_fallthru
        _
    $region48: #{tpu_custom_call.1} parent=5 // pred_fallthru
      _
  $region6: #{tpu_custom_call.1} parent=0 // loop_footer
    %s15 = sadd.s32 1, %s11
  $region7: #{tpu_custom_call.1} parent=0 // loop_footer_branch
    %10 = sbr.rel target = $region3
  $region8: #{tpu_custom_call.1} parent=0 // loop_exit
    _

</llo_original>
